<compile_context>
chip_gen: v5e
topology: v5e:2x2
jax: 0.10.0
libtpu: 0.0.40
codegen_flags: <defaults>
</compile_context>

<pallas_src>
import functools

import jax
import jax.numpy as jnp
from jax import lax
from jax.experimental import pallas as pl
from jax.experimental.pallas import tpu as pltpu

_LANE = 128


def _charbonnier_kernel(x_ref, y_ref, out_ref, acc_ref, *,
                        eps2, rows, tile_rows, tiles_per_part, num_tiles,
                        need_mask):
    i = pl.program_id(1)

    @pl.when(i == 0)
    def _():
        acc_ref[...] = jnp.zeros_like(acc_ref)

    d = x_ref[...].astype(jnp.float32) - y_ref[...].astype(jnp.float32)
    v = jnp.sqrt(d * d + jnp.float32(eps2))

    def accumulate(vals):
        if tile_rows % 8 == 0:
            # Pure VALU adds of tr/8 vregs into a single-vreg accumulator.
            acc_ref[...] += jnp.sum(
                vals.reshape(tile_rows // 8, 8, _LANE), axis=0)
        else:
            # Tiny single-step case (rows < tile_rows and not 8-aligned):
            # one cross-sublane reduce into a (1, 128) accumulator.
            acc_ref[...] += jnp.sum(vals, axis=0, keepdims=True)

    if not need_mask:
        accumulate(v)
    else:
        # Logical row-tile index (un-clamped; the index_map clamps the DMA).
        t = pl.program_id(0) * tiles_per_part + i

        @pl.when(t < num_tiles - 1)
        def _():
            accumulate(v)

        @pl.when(t >= num_tiles - 1)
        def _():
            # Last real (possibly partial) tile and any clamped duplicate
            # tiles: zero out rows past `rows`.
            # INVARIANT: this must stay a select (`jnp.where`).  Rows past the
            # array end hold undefined VMEM contents (possibly NaN/Inf); a
            # multiply-by-0/1 mask would leak NaN (Inf * 0 == NaN), a select
            # does not.
            row = lax.broadcasted_iota(jnp.int32, v.shape, 0)
            global_row = t * tile_rows + row
            accumulate(jnp.where(global_row < rows, v, jnp.float32(0.0)))

    @pl.when(i == pl.num_programs(1) - 1)
    def _():
        out_ref[0, 0] = jnp.sum(acc_ref[...])


def charbonnier_loss(x, y, eps=1e-3, *, tile_rows=4096, num_partitions=1,
                     core_parallel=False):
    """Exact semantics of the PyTorch CharbonnierLoss module.

    num_partitions>1 with core_parallel=True shards the reduction across
    TensorCores (only useful on multi-TC chips like v7x).
    """
    assert x.shape == y.shape
    n = int(x.size)
    eps2 = float(eps) * float(eps)

    xf = x.reshape(-1)
    yf = y.reshape(-1)

    n_aligned = (n // _LANE) * _LANE
    tail = n - n_aligned

    total = jnp.float32(0.0)

    if n_aligned:
        rows = n_aligned // _LANE
        if tail:
            # Kernel runs on the 128-aligned prefix only (no full-array pad).
            x2 = xf[:n_aligned].reshape(rows, _LANE)
            y2 = yf[:n_aligned].reshape(rows, _LANE)
        else:
            x2 = xf.reshape(rows, _LANE)
            y2 = yf.reshape(rows, _LANE)

        # Block row count: large (multiple of 8) when there is a lot of data,
        # otherwise exactly `rows` (a full-extent block dim is always legal).
        tr = tile_rows if rows >= tile_rows else rows
        nt = (rows + tr - 1) // tr                    # total number of row tiles
        p_parts = num_partitions if nt >= num_partitions else 1
        tpp = (nt + p_parts - 1) // p_parts           # tiles per partition
        need_mask = (nt * tr != rows) or (p_parts * tpp != nt)

        def in_map(p, i):
            # Clamp so the DMA never targets a block entirely outside the
            # array; those (t >= nt) contributions are masked to zero in-kernel.
            return (jnp.minimum(p * tpp + i, nt - 1), 0)

        acc_rows = 8 if tr % 8 == 0 else 1

        # Only raise the scoped-VMEM limit when the requested tiles need it;
        # the default tile (4096 rows f32 -> 8 MiB of input buffers) fits every
        # generation's default.
        block_bytes = tr * _LANE * x2.dtype.itemsize
        vmem_needed = 2 * 2 * block_bytes + (2 << 20)
        vmem_limit = vmem_needed if vmem_needed > (16 << 20) else None

        axis0 = (pltpu.CORE_PARALLEL if (core_parallel and p_parts > 1)
                 else pltpu.PARALLEL)

        partials = pl.pallas_call(
            functools.partial(_charbonnier_kernel, eps2=eps2, rows=rows,
                              tile_rows=tr, tiles_per_part=tpp, num_tiles=nt,
                              need_mask=need_mask),
            out_shape=jax.ShapeDtypeStruct((p_parts, 1), jnp.float32),
            grid=(p_parts, tpp),
            in_specs=[pl.BlockSpec((tr, _LANE), in_map),
                      pl.BlockSpec((tr, _LANE), in_map)],
            out_specs=pl.BlockSpec((1, 1), lambda p, i: (p, 0),
                                   memory_space=pltpu.SMEM),
            scratch_shapes=[pltpu.VMEM((acc_rows, _LANE), jnp.float32)],
            compiler_params=pltpu.CompilerParams(
                dimension_semantics=(axis0, pltpu.ARBITRARY),
                vmem_limit_bytes=vmem_limit),
        )(x2, y2)
        total = total + jnp.sum(partials)

    if tail:
        # <128 trailing elements: cheaper to sum wrapper-side than to pad and
        # re-stream both full inputs through HBM.
        dt = (xf[n_aligned:].astype(jnp.float32)
              - yf[n_aligned:].astype(jnp.float32))
        total = total + jnp.sum(jnp.sqrt(dt * dt + jnp.float32(eps2)))

    return total / jnp.float32(n)


if __name__ == "__main__":
    key = jax.random.PRNGKey(0)
    kx, ky = jax.random.split(key)

    def ref_loss(x, y, eps=1e-3):
        d = x.astype(jnp.float32) - y.astype(jnp.float32)
        return jnp.mean(jnp.sqrt(d * d + jnp.float32(eps * eps)))

    # 1) Primary NCHW case (128-aligned, single tile, no mask).
    shape = (2, 4, 16, 16)
    x = jax.random.normal(kx, shape, dtype=jnp.float32)
    y = jax.random.normal(ky, shape, dtype=jnp.float32)
    loss = jax.block_until_ready(charbonnier_loss(x, y, eps=1e-3))
    assert jnp.allclose(loss, ref_loss(x, y), rtol=1e-5, atol=1e-6), loss

    # 2) Ragged case (n % 128 != 0): exercises the wrapper tail path and the
    #    non-multiple-of-8 single-tile accumulate.
    shape2 = (2, 3, 17, 19)
    x2 = jax.random.normal(jax.random.fold_in(kx, 1), shape2, dtype=jnp.float32)
    y2 = jax.random.normal(jax.random.fold_in(ky, 1), shape2, dtype=jnp.float32)
    loss2 = jax.block_until_ready(charbonnier_loss(x2, y2, eps=1e-3))
    assert jnp.allclose(loss2, ref_loss(x2, y2), rtol=1e-5, atol=1e-6), loss2

    # 3) Multi-tile, two partitions, clamped tail tile (3 tiles over 2
    #    partitions): exercises cross-step accumulation and the gated mask.
    shape3 = (2, 3, 64, 64)
    x3 = jax.random.normal(jax.random.fold_in(kx, 2), shape3, dtype=jnp.float32)
    y3 = jax.random.normal(jax.random.fold_in(ky, 2), shape3, dtype=jnp.float32)
    loss3 = jax.block_until_ready(
        charbonnier_loss(x3, y3, eps=1e-3, tile_rows=64, num_partitions=2))
    assert jnp.allclose(loss3, ref_loss(x3, y3), rtol=1e-5, atol=1e-6), loss3

    # 4) Partial last row-tile with a single partition (rows % tile_rows != 0):
    #    only the tail tile pays the masking cost.
    shape4 = (2, 3, 40, 64)
    x4 = jax.random.normal(jax.random.fold_in(kx, 3), shape4, dtype=jnp.float32)
    y4 = jax.random.normal(jax.random.fold_in(ky, 3), shape4, dtype=jnp.float32)
    loss4 = jax.block_until_ready(
        charbonnier_loss(x4, y4, eps=1e-3, tile_rows=32))
    assert jnp.allclose(loss4, ref_loss(x4, y4), rtol=1e-5, atol=1e-6), loss4

    # 5) bf16 inputs: cast to f32 happens after the VMEM load inside the kernel.
    xb = x.astype(jnp.bfloat16)
    yb = y.astype(jnp.bfloat16)
    lossb = jax.block_until_ready(charbonnier_loss(xb, yb, eps=1e-3))
    assert jnp.allclose(lossb, ref_loss(xb, yb), rtol=1e-3, atol=1e-4), lossb

    print("KERNEL_OK")
</pallas_src>

<mosaic_0001>
module attributes {stable_mosaic.version = 11 : i64} {
  func.func @_charbonnier_kernel(%arg0: i32, %arg1: i32, %arg2: memref<16x128xf32, #tpu.memory_space<vmem>>, %arg3: memref<16x128xf32, #tpu.memory_space<vmem>>, %arg4: memref<1x1xf32, #tpu.memory_space<smem>>, %arg5: memref<8x128xf32, #tpu.memory_space<vmem>>) attributes {dimension_semantics = [#tpu.dimension_semantics<parallel>, #tpu.dimension_semantics<arbitrary>], iteration_bounds = array<i64: 1, 1>, scalar_prefetch = 0 : i64, scratch_operands = 1 : i64, tpu.core_type = #tpu.core_type<tc>, window_params = [{transform_indices = @transform_0, window_bounds = array<i64: 16, 128>}, {transform_indices = @transform_1, window_bounds = array<i64: 16, 128>}, {transform_indices = @transform_2, window_bounds = array<i64: 1, 1>}]} {
    %c0_i32 = arith.constant 0 : i32
    %0 = arith.cmpi eq, %arg1, %c0_i32 : i32
    %1 = arith.extui %0 : i1 to i32
    %c0_i32_0 = arith.constant 0 : i32
    %2 = arith.cmpi ne, %1, %c0_i32_0 : i32
    scf.if %2 {
      %cst_11 = arith.constant 0.000000e+00 : f32
      %18 = vector.broadcast %cst_11 : f32 to vector<8x128xf32>
      %c0_12 = arith.constant 0 : index
      %c0_13 = arith.constant 0 : index
      %19 = vector.load %arg5[%c0_12, %c0_13] : memref<8x128xf32, #tpu.memory_space<vmem>>, vector<8x128xf32>
      tpu.vector_store %arg5[%c0_12, %c0_13], %18 {strides = array<i32>} : memref<8x128xf32, #tpu.memory_space<vmem>>, vector<8x128xf32>,
    } else {
    }
    %c0 = arith.constant 0 : index
    %c0_1 = arith.constant 0 : index
    %3 = vector.load %arg2[%c0, %c0_1] : memref<16x128xf32, #tpu.memory_space<vmem>>, vector<16x128xf32>
    %c0_2 = arith.constant 0 : index
    %c0_3 = arith.constant 0 : index
    %4 = vector.load %arg3[%c0_2, %c0_3] : memref<16x128xf32, #tpu.memory_space<vmem>>, vector<16x128xf32>
    %5 = arith.subf %3, %4 : vector<16x128xf32>
    %6 = arith.mulf %5, %5 : vector<16x128xf32>
    %cst = arith.constant 9.99999997E-7 : f32
    %7 = vector.broadcast %cst : f32 to vector<16x128xf32>
    %8 = arith.addf %6, %7 : vector<16x128xf32>
    %9 = math.sqrt %8 : vector<16x128xf32>
    %c0_4 = arith.constant 0 : index
    %c0_5 = arith.constant 0 : index
    %10 = vector.load %arg5[%c0_4, %c0_5] : memref<8x128xf32, #tpu.memory_space<vmem>>, vector<8x128xf32>
    %11 = vector.shape_cast %9 : vector<16x128xf32> to vector<2x8x128xf32>
    %cst_6 = arith.constant dense<0.000000e+00> : vector<8x128xf32>
    %12 = vector.multi_reduction <add>, %11, %cst_6 [0] : vector<2x8x128xf32> to vector<8x128xf32>
    %13 = arith.addf %10, %12 : vector<8x128xf32>
    %c0_7 = arith.constant 0 : index
    %c0_8 = arith.constant 0 : index
    %14 = vector.load %arg5[%c0_7, %c0_8] : memref<8x128xf32, #tpu.memory_space<vmem>>, vector<8x128xf32>
    tpu.vector_store %arg5[%c0_7, %c0_8], %13 {strides = array<i32>} : memref<8x128xf32, #tpu.memory_space<vmem>>, vector<8x128xf32>,
    %c0_i32_9 = arith.constant 0 : i32
    %15 = arith.cmpi eq, %arg1, %c0_i32_9 : i32
    %16 = arith.extui %15 : i1 to i32
    %c0_i32_10 = arith.constant 0 : i32
    %17 = arith.cmpi ne, %16, %c0_i32_10 : i32
    scf.if %17 {
      %c0_11 = arith.constant 0 : index
      %c0_12 = arith.constant 0 : index
      %18 = vector.load %arg5[%c0_11, %c0_12] : memref<8x128xf32, #tpu.memory_space<vmem>>, vector<8x128xf32>
      %19 = vector.shape_cast %18 : vector<8x128xf32> to vector<1x8x128xf32>
      %cst_13 = arith.constant dense<0.000000e+00> : vector<1xf32>
      %20 = vector.multi_reduction <add>, %19, %cst_13 [1, 2] : vector<1x8x128xf32> to vector<1xf32>
      %21 = vector.shape_cast %20 : vector<1xf32> to vector<1x1x1xf32>
      %22 = vector.extract %21[0, 0, 0] : f32 from vector<1x1x1xf32>
      %c0_14 = arith.constant 0 : index
      %c0_15 = arith.constant 0 : index
      %23 = memref.load %arg4[%c0_14, %c0_15] : memref<1x1xf32, #tpu.memory_space<smem>>
      memref.store %22, %arg4[%c0_14, %c0_15] : memref<1x1xf32, #tpu.memory_space<smem>>
    } else {
    }
    return
  }
  func.func @transform_0(%arg0: i32, %arg1: i32) -> (i32, i32) {
    %c1_i32 = arith.constant 1 : i32
    %0 = arith.muli %arg0, %c1_i32 : i32
    %1 = arith.addi %0, %arg1 : i32
    %c0_i32 = arith.constant 0 : i32
    %2 = arith.minsi %1, %c0_i32 : i32
    %c0_i32_0 = arith.constant 0 : i32
    %c0_i32_1 = arith.constant 0 : i32
    return %2, %c0_i32_0 : i32, i32
  }
  func.func @transform_1(%arg0: i32, %arg1: i32) -> (i32, i32) {
    %c1_i32 = arith.constant 1 : i32
    %0 = arith.muli %arg0, %c1_i32 : i32
    %1 = arith.addi %0, %arg1 : i32
    %c0_i32 = arith.constant 0 : i32
    %2 = arith.minsi %1, %c0_i32 : i32
    %c0_i32_0 = arith.constant 0 : i32
    %c0_i32_1 = arith.constant 0 : i32
    return %2, %c0_i32_0 : i32, i32
  }
  func.func @transform_2(%arg0: i32, %arg1: i32) -> (i32, i32) {
    %c0_i32 = arith.constant 0 : i32
    %c0_i32_0 = arith.constant 0 : i32
    return %arg0, %c0_i32 : i32, i32
  }
}

</mosaic_0001>

<llo_original>
// kernel: tpu_custom_call.1
$region0: #{tpu_custom_call.1}
  #allocation0 [shape = 'u32[]', space=smem, size = 0x4, offset = 0x4, fixed_abs, tag = 'smem constant byte address 0x4 - core index']
  #allocation1 [shape = 'u32[72,128]{1,0:T(1,128)}', space=vmem, size = 0x9000, scoped, tag = 'internal scratch']
  #allocation2 [shape = 'f32[8,128]{1,0:T(8,128)}', space=vmem, size = 0x1000, scoped, tag = 'scratch operand']
  %s0 = inlined_call_operand.hbm [shape: f32[16,128], index: 0, kind: input, shape index: {}]
  %s1 = inlined_call_operand.hbm [shape: f32[16,128], index: 1, kind: input, shape index: {}]
  %s2 = inlined_call_operand.hbm [shape: f32[1,1], index: 2, kind: output, shape index: {}]
  %s3 = sld [smem:[#allocation0]]
  $region34: #{tpu_custom_call.1} parent=0
    _
  %s5 = ssub.s32 1, %s3
  %s6 = scalar_select 0, %s5, %s3
  $region1: #{tpu_custom_call.1} parent=0
    #allocation3 [shape = 'u8[8192]{0}', space=vmem, size = 0x2000, scoped, tag = 'input window, operand 0, single buffered']
    #allocation4 [shape = 's32[1]{0}', space=sflag, size = 0x4, scoped, tag = 'scoped memory for tpu_custom_call.1']
    #allocation5 [shape = 's32[1]{0}', space=sflag, size = 0x4, scoped, tag = 'scoped memory for tpu_custom_call.1']
    #allocation6 [shape = 'u8[8192]{0}', space=vmem, size = 0x2000, scoped, tag = 'input window, operand 1, single buffered']
    #allocation7 [shape = 's32[1]{0}', space=sflag, size = 0x4, scoped, tag = 'scoped memory for tpu_custom_call.1']
    #allocation8 [shape = 'u8[512]{0}', space=smem, size = 0x200, scoped, tag = 'output window, operand 0, single buffered']
    %7 = vsyncpa [#allocation4], 0
    %8 = vsyncpa [#allocation7], 0
    %9 = vsyncpa [#allocation5], 0
    // Predicated region
    $region2: #{tpu_custom_call.1} parent=1 // pred_check
      _
    $region3: #{tpu_custom_call.1} parent=1 // pred_check_branch
      %11 = sbr.rel (0) target = $region5
    $region4: #{tpu_custom_call.1} parent=1 // pred_region
      %s12 = sadd.s32 0, 0
      %p13 = scmp.lt.s32.totalorder %s12, 0
      %s14 = scalar_select %p13, %s12, 0
      %s15 = smul.u32 2, %s14
      %17 = vsyncadd [#allocation4], 0
      %s18 = smul.addr %s15, 8
      %s19 = scalar_lea.hbm %s0, %s18
      %s20 = sshll.u32 %s19, 4
      %s21 = int_to_ptr.hbm [resolvable:$true] %s20
      %s22 = sshll.u32 [#allocation3], 4
      %s23 = int_to_ptr.vmem [resolvable:$true] %s22
      %28 = dma.hbm_to_vmem [thread:$0]  %s21, 256, %s23, [#allocation4], 128, 128, 8
    $region5: #{tpu_custom_call.1} parent=1 // pred_fallthru
      _
    // Predicated region
    $region6: #{tpu_custom_call.1} parent=1 // pred_check
      _
    $region7: #{tpu_custom_call.1} parent=1 // pred_check_branch
      %30 = sbr.rel (0) target = $region9
    $region8: #{tpu_custom_call.1} parent=1 // pred_region
      %s31 = sadd.s32 0, 0
      %p32 = scmp.lt.s32.totalorder %s31, 0
      %s33 = scalar_select %p32, %s31, 0
      %s34 = smul.u32 2, %s33
      %36 = vsyncadd [#allocation7], 0
      %s37 = smul.addr %s34, 8
      %s38 = scalar_lea.hbm %s1, %s37
      %s39 = sshll.u32 %s38, 4
      %s40 = int_to_ptr.hbm [resolvable:$true] %s39
      %s41 = sshll.u32 [#allocation6], 4
      %s42 = int_to_ptr.vmem [resolvable:$true] %s41
      %47 = dma.hbm_to_vmem [thread:$0]  %s40, 256, %s42, [#allocation7], 128, 128, 8
    $region9: #{tpu_custom_call.1} parent=1 // pred_fallthru
      _
    // Predicated region
    $region10: #{tpu_custom_call.1} parent=1 // pred_check
      _
    $region11: #{tpu_custom_call.1} parent=1 // pred_check_branch
      %49 = sbr.rel (0) target = $region13
    $region12: #{tpu_custom_call.1} parent=1 // pred_region
      %51 = dma.done [#allocation4], 256
    $region13: #{tpu_custom_call.1} parent=1 // pred_fallthru
      _
    // Predicated region
    $region14: #{tpu_custom_call.1} parent=1 // pred_check
      _
    $region15: #{tpu_custom_call.1} parent=1 // pred_check_branch
      %53 = sbr.rel (0) target = $region17
    $region16: #{tpu_custom_call.1} parent=1 // pred_region
      %55 = dma.done [#allocation7], 256
    $region17: #{tpu_custom_call.1} parent=1 // pred_fallthru
      _
    %s56 = sadd.s32 0, 0
    %p57 = scmp.lt.s32.totalorder %s56, 0
    %s58 = scalar_select %p57, %s56, 0
    %s59 = smul.u32 2, %s58
    %s60 = sadd.s32 0, 0
    %p61 = scmp.lt.s32.totalorder %s60, 0
    %s62 = scalar_select %p61, %s60, 0
    %s63 = smul.u32 2, %s62
    %p64 = scmp.eq.s32.totalorder 0, 0
    // Predicated region
    $region18: #{tpu_custom_call.1} parent=1 // pred_check
      %p65 = pneg %p64
    $region19: #{tpu_custom_call.1} parent=1 // pred_check_branch
      %67 = sbr.rel (%p65) target = $region21
    $region20: #{tpu_custom_call.1} parent=1 // pred_region
      %68 = vst [vmem:[#allocation2] sm:$0xff] 0.0
    $region21: #{tpu_custom_call.1} parent=1 // pred_fallthru
      _
    %v69 = vld [vmem:[#allocation3] sm:$0xff]
    %v70 = vld [vmem:[#allocation3 + $0x8] sm:$0xff]
    %v71 = vld [vmem:[#allocation6] sm:$0xff]
    %v72 = vld [vmem:[#allocation6 + $0x8] sm:$0xff]
    %v73 = vsub.f32 %v69, %v71
    %v74 = vsub.f32 %v70, %v72
    %v75 = vmul.f32 %v73, %v73
    %v76 = vmul.f32 %v74, %v74
    %v77 = vadd.f32 %v75, 1e-06
    %v78 = vadd.f32 %v76, 1e-06
    %v79 = vrsqrt.pop %v77
    %v80 = vmul.f32 %v79, %v77
    %v81 = vmul.f32 %v80, %v79
    %v82 = vmul.f32 0.5, %v81
    %v83 = vsub.f32 1.5, %v82
    %v84 = vmul.f32 %v79, %v83
    %v85 = vmul.f32 %v77, %v84
    %vm86 = vcmp.eq.f32.partialorder %v77, inf
    %v87 = vsel %vm86, %v77, %v85
    %vm88 = vcmp.eq.f32.partialorder %v77, 0.0
    %v89 = vand.u32 %v77, 2147483648
    %v90 = vsel %vm88, %v89, %v87
    %v91 = vrsqrt.pop %v78
    %v92 = vmul.f32 %v91, %v78
    %v93 = vmul.f32 %v92, %v91
    %v94 = vmul.f32 0.5, %v93
    %v95 = vsub.f32 1.5, %v94
    %v96 = vmul.f32 %v91, %v95
    %v97 = vmul.f32 %v78, %v96
    %vm98 = vcmp.eq.f32.partialorder %v78, inf
    %v99 = vsel %vm98, %v78, %v97
    %vm100 = vcmp.eq.f32.partialorder %v78, 0.0
    %v101 = vand.u32 %v78, 2147483648
    %v102 = vsel %vm100, %v101, %v99
    %v103 = vld [vmem:[#allocation2] sm:$0xff]
    %v104 = vadd.f32 %v90, %v102
    %v105 = vadd.f32 %v103, %v104
    %106 = vst [vmem:[#allocation2] sm:$0xff] %v105
    // Predicated region
    $region22: #{tpu_custom_call.1} parent=1 // pred_check
      %p107 = pneg %p64
    $region23: #{tpu_custom_call.1} parent=1 // pred_check_branch
      %109 = sbr.rel (%p107) target = $region25
    $region24: #{tpu_custom_call.1} parent=1 // pred_region
      %v110 = vld [vmem:[#allocation2] sm:$0xff]
      %111 = vadd.xlane.f32.xlu0 %v110
      %v112 = vpop.xlane.xlu0 %111
      %v113 = vrot.slane %v112, 4
      %v114 = vadd.f32 %v112, %v113
      %v115 = vrot.slane %v114, 2
      %v116 = vadd.f32 %v114, %v115
      %v117 = vrot.slane %v116, 1
      %v118 = vadd.f32 %v116, %v117
      %s119 = vtos %v118
      %s120 = scalar_lea.smem [#allocation8], 0
      %121 = sst [smem:[%s120]] %s119
    $region25: #{tpu_custom_call.1} parent=1 // pred_fallthru
      _
    // Predicated region
    $region26: #{tpu_custom_call.1} parent=1 // pred_check
      _
    $region27: #{tpu_custom_call.1} parent=1 // pred_check_branch
      %123 = sbr.rel (0) target = $region29
    $region28: #{tpu_custom_call.1} parent=1 // pred_region
      %125 = vsyncadd [#allocation5], 0
      %s127 = sshll.u32 %s2, 4
      %s128 = int_to_ptr.hbm [resolvable:$true] %s127
      %130 = dma.smem_to_hbm [#allocation8], 16, %s128, [#allocation5]
    $region29: #{tpu_custom_call.1} parent=1 // pred_fallthru
      _
    // Predicated region
    $region30: #{tpu_custom_call.1} parent=1 // pred_check
      _
    $region31: #{tpu_custom_call.1} parent=1 // pred_check_branch
      %132 = sbr.rel (0) target = $region33
    $region32: #{tpu_custom_call.1} parent=1 // pred_region
      %134 = dma.done [#allocation5], 16
    $region33: #{tpu_custom_call.1} parent=1 // pred_fallthru
      _
    %135 = sfence
    %136 = vsyncpa [#allocation4], 1
    %137 = vsyncpa [#allocation7], 1
    %138 = vsyncpa [#allocation5], 1

</llo_original>
